<compile_context>
chip_gen: v5e
topology: v5e:2x2
jax: 0.10.0
libtpu: 0.0.40
codegen_flags: <defaults>
</compile_context>

<pallas_src>
import math

import jax
import jax.numpy as jnp
from jax import lax
from jax.experimental import pallas as pl
from jax.experimental.pallas import tpu as pltpu

_LANES = 128
_MAX_BLK_ROWS = 1024
_INV_SQRT2 = 1.0 / math.sqrt(2.0)


def _gmm_kernel(x_ref, p_ref, o_ref):
    # x_ref: (1, blk, 128), p_ref: (1, 9, blk, 128), o_ref: (1, blk, 128)
    x = x_ref[0]                              # (blk, 128)

    prob0 = p_ref[0, 0]
    prob1 = p_ref[0, 3]
    prob2 = p_ref[0, 6]

    # Numerically stable softmax over the 3 mixture logits; fold the global
    # 0.5 CDF-difference factor into the weights.
    m = jnp.maximum(jnp.maximum(prob0, prob1), prob2)
    e0 = jnp.exp(prob0 - m)
    e1 = jnp.exp(prob1 - m)
    e2 = jnp.exp(prob2 - m)
    half_inv_den = 0.5 * pl.reciprocal(e0 + e1 + e2, approx=False)
    w0 = e0 * half_inv_den
    w1 = e1 * half_inv_den
    w2 = e2 * half_inv_den

    def lik(mean, scale):
        # 2 * |CDF(x+0.5) - CDF(x-0.5)| = |erf(t+h) - erf(t-h)|
        inv_s = pl.reciprocal(jnp.maximum(scale, 1e-6), approx=False) * _INV_SQRT2
        t = (x - mean) * inv_s
        h = 0.5 * inv_s
        return jnp.abs(lax.erf(t + h) - lax.erf(t - h))

    mix = w0 * lik(p_ref[0, 1], p_ref[0, 2])
    mix = mix + w1 * lik(p_ref[0, 4], p_ref[0, 5])
    mix = mix + w2 * lik(p_ref[0, 7], p_ref[0, 8])

    # Low_bound on final likelihood
    o_ref[0] = jnp.maximum(mix, 1e-6)


def distribution_for_entropy2(x, p_dec):
    """x: (B, C, H, W) float32; p_dec: (B, 9, C, H, W) float32 -> (B, C, H, W)."""
    B, C, H, W = x.shape
    assert p_dec.shape == (B, 9, C, H, W), p_dec.shape

    N = C * H * W
    rows = pl.cdiv(N, _LANES)
    rows8 = pl.cdiv(rows, 8) * 8                    # row tile must be multiple of 8
    blk = min(_MAX_BLK_ROWS, rows8)
    rows_pad = pl.cdiv(rows, blk) * blk
    n_pad = rows_pad * _LANES

    # Reshape-only layout (no transpose of p_dec); pad only the small remainder.
    x_flat = x.reshape(B, N)
    p_flat = p_dec.reshape(B, 9, N)
    if n_pad != N:
        pad = n_pad - N
        x_flat = jnp.pad(x_flat, ((0, 0), (0, pad)))
        p_flat = jnp.pad(p_flat, ((0, 0), (0, 0), (0, pad)))
    x_3d = x_flat.reshape(B, rows_pad, _LANES)
    p_4d = p_flat.reshape(B, 9, rows_pad, _LANES)

    grid = (B, rows_pad // blk)

    out_3d = pl.pallas_call(
        _gmm_kernel,
        out_shape=jax.ShapeDtypeStruct((B, rows_pad, _LANES), x.dtype),
        grid_spec=pltpu.PrefetchScalarGridSpec(
            num_scalar_prefetch=0,
            grid=grid,
            in_specs=[
                pl.BlockSpec((1, blk, _LANES), lambda b, i: (b, i, 0)),
                pl.BlockSpec((1, 9, blk, _LANES), lambda b, i: (b, 0, i, 0)),
            ],
            out_specs=pl.BlockSpec((1, blk, _LANES), lambda b, i: (b, i, 0)),
        ),
        compiler_params=pltpu.CompilerParams(
            dimension_semantics=("parallel", "parallel"),
            vmem_limit_bytes=32 * 1024 * 1024,
        ),
    )(x_3d, p_4d)

    return out_3d.reshape(B, n_pad)[:, :N].reshape(B, C, H, W)


def _reference(x, p_dec):
    """Pure-JAX reference for correctness checking."""
    chunks = [p_dec[:, i] for i in range(9)]
    prob0, mean0, scale0, prob1, mean1, scale1, prob2, mean2, scale2 = chunks
    probs = jax.nn.softmax(jnp.stack([prob0, prob1, prob2], axis=-1), axis=-1)
    s0 = jnp.maximum(scale0, 1e-6)
    s1 = jnp.maximum(scale1, 1e-6)
    s2 = jnp.maximum(scale2, 1e-6)

    def cdf(v, mu, s):
        return 0.5 * (1.0 + lax.erf((v - mu) / (s * math.sqrt(2.0))))

    l0 = jnp.abs(cdf(x + 0.5, mean0, s0) - cdf(x - 0.5, mean0, s0))
    l1 = jnp.abs(cdf(x + 0.5, mean1, s1) - cdf(x - 0.5, mean1, s1))
    l2 = jnp.abs(cdf(x + 0.5, mean2, s2) - cdf(x - 0.5, mean2, s2))
    mix = probs[..., 0] * l0 + probs[..., 1] * l1 + probs[..., 2] * l2
    return jnp.maximum(mix, 1e-6)


if __name__ == "__main__":
    B, C, H, W = 2, 4, 16, 16
    key = jax.random.PRNGKey(0)
    kx, kp = jax.random.split(key)

    # Quantized-looking symbols and decoder parameter maps.
    x = jnp.round(jax.random.normal(kx, (B, C, H, W), dtype=jnp.float32) * 4.0)
    p_dec = jax.random.normal(kp, (B, 9, C, H, W), dtype=jnp.float32)
    # Make the scale channels positive-ish (module clamps them anyway).
    p_dec = p_dec.at[:, 2].set(jnp.abs(p_dec[:, 2]) + 0.1)
    p_dec = p_dec.at[:, 5].set(jnp.abs(p_dec[:, 5]) + 0.1)
    p_dec = p_dec.at[:, 8].set(jnp.abs(p_dec[:, 8]) + 0.1)

    out = distribution_for_entropy2(x, p_dec)
    out = jax.block_until_ready(out)

    ref = _reference(x, p_dec)
    assert out.shape == (B, C, H, W)
    assert jnp.allclose(out, ref, atol=1e-5, rtol=1e-5), (
        float(jnp.max(jnp.abs(out - ref))))

    print("KERNEL_OK")
</pallas_src>

<mosaic_0001>
module attributes {stable_mosaic.version = 11 : i64} {
  func.func @_gmm_kernel(%arg0: i32, %arg1: i32, %arg2: memref<1x8x128xf32, #tpu.memory_space<vmem>>, %arg3: memref<1x9x8x128xf32, #tpu.memory_space<vmem>>, %arg4: memref<1x8x128xf32, #tpu.memory_space<vmem>>) attributes {dimension_semantics = [#tpu.dimension_semantics<parallel>, #tpu.dimension_semantics<parallel>], iteration_bounds = array<i64: 2, 1>, scalar_prefetch = 0 : i64, scratch_operands = 0 : i64, tpu.core_type = #tpu.core_type<tc>, window_params = [{transform_indices = @transform_0, window_bounds = array<i64: 1, 8, 128>}, {transform_indices = @transform_1, window_bounds = array<i64: 1, 9, 8, 128>}, {transform_indices = @transform_2, window_bounds = array<i64: 1, 8, 128>}]} {
    %c0 = arith.constant 0 : index
    %c0_0 = arith.constant 0 : index
    %c0_1 = arith.constant 0 : index
    %0 = vector.load %arg2[%c0, %c0_0, %c0_1] : memref<1x8x128xf32, #tpu.memory_space<vmem>>, vector<1x8x128xf32>
    %1 = vector.shape_cast %0 : vector<1x8x128xf32> to vector<8x128xf32>
    %c0_2 = arith.constant 0 : index
    %c0_3 = arith.constant 0 : index
    %c0_4 = arith.constant 0 : index
    %c0_5 = arith.constant 0 : index
    %2 = vector.load %arg3[%c0_2, %c0_3, %c0_4, %c0_5] : memref<1x9x8x128xf32, #tpu.memory_space<vmem>>, vector<1x1x8x128xf32>
    %3 = vector.shape_cast %2 : vector<1x1x8x128xf32> to vector<8x128xf32>
    %c0_6 = arith.constant 0 : index
    %c3 = arith.constant 3 : index
    %c0_7 = arith.constant 0 : index
    %c0_8 = arith.constant 0 : index
    %4 = vector.load %arg3[%c0_6, %c3, %c0_7, %c0_8] : memref<1x9x8x128xf32, #tpu.memory_space<vmem>>, vector<1x1x8x128xf32>
    %5 = vector.shape_cast %4 : vector<1x1x8x128xf32> to vector<8x128xf32>
    %c0_9 = arith.constant 0 : index
    %c6 = arith.constant 6 : index
    %c0_10 = arith.constant 0 : index
    %c0_11 = arith.constant 0 : index
    %6 = vector.load %arg3[%c0_9, %c6, %c0_10, %c0_11] : memref<1x9x8x128xf32, #tpu.memory_space<vmem>>, vector<1x1x8x128xf32>
    %7 = vector.shape_cast %6 : vector<1x1x8x128xf32> to vector<8x128xf32>
    %8 = arith.maximumf %3, %5 : vector<8x128xf32>
    %9 = arith.maximumf %8, %7 : vector<8x128xf32>
    %10 = arith.subf %3, %9 : vector<8x128xf32>
    %11 = math.exp %10 : vector<8x128xf32>
    %12 = arith.subf %5, %9 : vector<8x128xf32>
    %13 = math.exp %12 : vector<8x128xf32>
    %14 = arith.subf %7, %9 : vector<8x128xf32>
    %15 = math.exp %14 : vector<8x128xf32>
    %16 = arith.addf %11, %13 : vector<8x128xf32>
    %17 = arith.addf %16, %15 : vector<8x128xf32>
    %18 = tpu.reciprocal %17 : vector<8x128xf32> -> vector<8x128xf32>
    %cst = arith.constant 5.000000e-01 : f32
    %19 = vector.broadcast %cst : f32 to vector<8x128xf32>
    %20 = arith.mulf %19, %18 : vector<8x128xf32>
    %21 = arith.mulf %11, %20 : vector<8x128xf32>
    %22 = arith.mulf %13, %20 : vector<8x128xf32>
    %23 = arith.mulf %15, %20 : vector<8x128xf32>
    %c0_12 = arith.constant 0 : index
    %c1 = arith.constant 1 : index
    %c0_13 = arith.constant 0 : index
    %c0_14 = arith.constant 0 : index
    %24 = vector.load %arg3[%c0_12, %c1, %c0_13, %c0_14] : memref<1x9x8x128xf32, #tpu.memory_space<vmem>>, vector<1x1x8x128xf32>
    %25 = vector.shape_cast %24 : vector<1x1x8x128xf32> to vector<8x128xf32>
    %c0_15 = arith.constant 0 : index
    %c2 = arith.constant 2 : index
    %c0_16 = arith.constant 0 : index
    %c0_17 = arith.constant 0 : index
    %26 = vector.load %arg3[%c0_15, %c2, %c0_16, %c0_17] : memref<1x9x8x128xf32, #tpu.memory_space<vmem>>, vector<1x1x8x128xf32>
    %27 = vector.shape_cast %26 : vector<1x1x8x128xf32> to vector<8x128xf32>
    %cst_18 = arith.constant 9.99999997E-7 : f32
    %28 = vector.broadcast %cst_18 : f32 to vector<8x128xf32>
    %29 = arith.maximumf %27, %28 : vector<8x128xf32>
    %30 = tpu.reciprocal %29 : vector<8x128xf32> -> vector<8x128xf32>
    %cst_19 = arith.constant 0.707106769 : f32
    %31 = vector.broadcast %cst_19 : f32 to vector<8x128xf32>
    %32 = arith.mulf %30, %31 : vector<8x128xf32>
    %33 = arith.subf %1, %25 : vector<8x128xf32>
    %34 = arith.mulf %33, %32 : vector<8x128xf32>
    %cst_20 = arith.constant 5.000000e-01 : f32
    %35 = vector.broadcast %cst_20 : f32 to vector<8x128xf32>
    %36 = arith.mulf %35, %32 : vector<8x128xf32>
    %37 = arith.addf %34, %36 : vector<8x128xf32>
    %38 = math.erf %37 : vector<8x128xf32>
    %39 = arith.subf %34, %36 : vector<8x128xf32>
    %40 = math.erf %39 : vector<8x128xf32>
    %41 = arith.subf %38, %40 : vector<8x128xf32>
    %42 = math.absf %41 : vector<8x128xf32>
    %43 = arith.mulf %21, %42 : vector<8x128xf32>
    %c0_21 = arith.constant 0 : index
    %c4 = arith.constant 4 : index
    %c0_22 = arith.constant 0 : index
    %c0_23 = arith.constant 0 : index
    %44 = vector.load %arg3[%c0_21, %c4, %c0_22, %c0_23] : memref<1x9x8x128xf32, #tpu.memory_space<vmem>>, vector<1x1x8x128xf32>
    %45 = vector.shape_cast %44 : vector<1x1x8x128xf32> to vector<8x128xf32>
    %c0_24 = arith.constant 0 : index
    %c5 = arith.constant 5 : index
    %c0_25 = arith.constant 0 : index
    %c0_26 = arith.constant 0 : index
    %46 = vector.load %arg3[%c0_24, %c5, %c0_25, %c0_26] : memref<1x9x8x128xf32, #tpu.memory_space<vmem>>, vector<1x1x8x128xf32>
    %47 = vector.shape_cast %46 : vector<1x1x8x128xf32> to vector<8x128xf32>
    %cst_27 = arith.constant 9.99999997E-7 : f32
    %48 = vector.broadcast %cst_27 : f32 to vector<8x128xf32>
    %49 = arith.maximumf %47, %48 : vector<8x128xf32>
    %50 = tpu.reciprocal %49 : vector<8x128xf32> -> vector<8x128xf32>
    %cst_28 = arith.constant 0.707106769 : f32
    %51 = vector.broadcast %cst_28 : f32 to vector<8x128xf32>
    %52 = arith.mulf %50, %51 : vector<8x128xf32>
    %53 = arith.subf %1, %45 : vector<8x128xf32>
    %54 = arith.mulf %53, %52 : vector<8x128xf32>
    %cst_29 = arith.constant 5.000000e-01 : f32
    %55 = vector.broadcast %cst_29 : f32 to vector<8x128xf32>
    %56 = arith.mulf %55, %52 : vector<8x128xf32>
    %57 = arith.addf %54, %56 : vector<8x128xf32>
    %58 = math.erf %57 : vector<8x128xf32>
    %59 = arith.subf %54, %56 : vector<8x128xf32>
    %60 = math.erf %59 : vector<8x128xf32>
    %61 = arith.subf %58, %60 : vector<8x128xf32>
    %62 = math.absf %61 : vector<8x128xf32>
    %63 = arith.mulf %22, %62 : vector<8x128xf32>
    %64 = arith.addf %43, %63 : vector<8x128xf32>
    %c0_30 = arith.constant 0 : index
    %c7 = arith.constant 7 : index
    %c0_31 = arith.constant 0 : index
    %c0_32 = arith.constant 0 : index
    %65 = vector.load %arg3[%c0_30, %c7, %c0_31, %c0_32] : memref<1x9x8x128xf32, #tpu.memory_space<vmem>>, vector<1x1x8x128xf32>
    %66 = vector.shape_cast %65 : vector<1x1x8x128xf32> to vector<8x128xf32>
    %c0_33 = arith.constant 0 : index
    %c8 = arith.constant 8 : index
    %c0_34 = arith.constant 0 : index
    %c0_35 = arith.constant 0 : index
    %67 = vector.load %arg3[%c0_33, %c8, %c0_34, %c0_35] : memref<1x9x8x128xf32, #tpu.memory_space<vmem>>, vector<1x1x8x128xf32>
    %68 = vector.shape_cast %67 : vector<1x1x8x128xf32> to vector<8x128xf32>
    %cst_36 = arith.constant 9.99999997E-7 : f32
    %69 = vector.broadcast %cst_36 : f32 to vector<8x128xf32>
    %70 = arith.maximumf %68, %69 : vector<8x128xf32>
    %71 = tpu.reciprocal %70 : vector<8x128xf32> -> vector<8x128xf32>
    %cst_37 = arith.constant 0.707106769 : f32
    %72 = vector.broadcast %cst_37 : f32 to vector<8x128xf32>
    %73 = arith.mulf %71, %72 : vector<8x128xf32>
    %74 = arith.subf %1, %66 : vector<8x128xf32>
    %75 = arith.mulf %74, %73 : vector<8x128xf32>
    %cst_38 = arith.constant 5.000000e-01 : f32
    %76 = vector.broadcast %cst_38 : f32 to vector<8x128xf32>
    %77 = arith.mulf %76, %73 : vector<8x128xf32>
    %78 = arith.addf %75, %77 : vector<8x128xf32>
    %79 = math.erf %78 : vector<8x128xf32>
    %80 = arith.subf %75, %77 : vector<8x128xf32>
    %81 = math.erf %80 : vector<8x128xf32>
    %82 = arith.subf %79, %81 : vector<8x128xf32>
    %83 = math.absf %82 : vector<8x128xf32>
    %84 = arith.mulf %23, %83 : vector<8x128xf32>
    %85 = arith.addf %64, %84 : vector<8x128xf32>
    %cst_39 = arith.constant 9.99999997E-7 : f32
    %86 = vector.broadcast %cst_39 : f32 to vector<8x128xf32>
    %87 = arith.maximumf %85, %86 : vector<8x128xf32>
    %c0_40 = arith.constant 0 : index
    %c0_41 = arith.constant 0 : index
    %c0_42 = arith.constant 0 : index
    %88 = vector.load %arg4[%c0_40, %c0_41, %c0_42] : memref<1x8x128xf32, #tpu.memory_space<vmem>>, vector<1x8x128xf32>
    %89 = vector.shape_cast %88 : vector<1x8x128xf32> to vector<8x128xf32>
    %90 = vector.shape_cast %87 : vector<8x128xf32> to vector<1x8x128xf32>
    tpu.vector_store %arg4[%c0_40, %c0_41, %c0_42], %90 {strides = array<i32>} : memref<1x8x128xf32, #tpu.memory_space<vmem>>, vector<1x8x128xf32>,
    return
  }
  func.func @transform_0(%arg0: i32, %arg1: i32) -> (i32, i32, i32) {
    %c0_i32 = arith.constant 0 : i32
    %c0_i32_0 = arith.constant 0 : i32
    return %arg0, %arg1, %c0_i32 : i32, i32, i32
  }
  func.func @transform_1(%arg0: i32, %arg1: i32) -> (i32, i32, i32, i32) {
    %c0_i32 = arith.constant 0 : i32
    %c0_i32_0 = arith.constant 0 : i32
    %c0_i32_1 = arith.constant 0 : i32
    return %arg0, %c0_i32, %arg1, %c0_i32_0 : i32, i32, i32, i32
  }
  func.func @transform_2(%arg0: i32, %arg1: i32) -> (i32, i32, i32) {
    %c0_i32 = arith.constant 0 : i32
    %c0_i32_0 = arith.constant 0 : i32
    return %arg0, %arg1, %c0_i32 : i32, i32, i32
  }
}

</mosaic_0001>

<llo_original>
// kernel: tpu_custom_call.1
$region0: #{tpu_custom_call.1}
  #allocation0 [shape = 'u32[]', space=smem, size = 0x4, offset = 0x4, fixed_abs, tag = 'smem constant byte address 0x4 - core index']
  #allocation1 [shape = 'u32[72,128]{1,0:T(1,128)}', space=vmem, size = 0x9000, scoped, tag = 'internal scratch']
  %s0 = inlined_call_operand.hbm [shape: f32[2,8,128], index: 0, kind: input, shape index: {}]
  %s1 = inlined_call_operand.hbm [shape: f32[2,9,8,128], index: 1, kind: input, shape index: {}]
  %s2 = inlined_call_operand.hbm [shape: f32[2,8,128], index: 2, kind: output, shape index: {}]
  %s3 = sld [smem:[#allocation0]]
  $region49: #{tpu_custom_call.1} parent=0
    _
  %s5 = ssub.s32 1, %s3
  %s6 = scalar_select 0, %s5, %s3
  $region1: #{tpu_custom_call.1} parent=0
    #allocation2 [shape = 'u8[8192]{0}', space=vmem, size = 0x2000, scoped, tag = 'input window, operand 0']
    #allocation3 [shape = 's32[2]{0}', space=sflag, size = 0x8, scoped, tag = 'scoped memory for tpu_custom_call.1']
    #allocation4 [shape = 's32[2]{0}', space=sflag, size = 0x8, scoped, tag = 'scoped memory for tpu_custom_call.1']
    #allocation5 [shape = 'u8[73728]{0}', space=vmem, size = 0x12000, scoped, tag = 'input window, operand 1']
    #allocation6 [shape = 's32[2]{0}', space=sflag, size = 0x8, scoped, tag = 'scoped memory for tpu_custom_call.1']
    #allocation7 [shape = 'u8[8192]{0}', space=vmem, size = 0x2000, scoped, tag = 'output window, operand 0']
    %7 = vsyncpa [#allocation3], 0
    %s8 = scalar_lea.sflag [#allocation3], 1
    %9 = vsyncpa %s8, 0
    %10 = vsyncpa [#allocation6], 0
    %s11 = scalar_lea.sflag [#allocation6], 1
    %12 = vsyncpa %s11, 0
    %13 = vsyncpa [#allocation4], 0
    %s14 = scalar_lea.sflag [#allocation4], 1
    %15 = vsyncpa %s14, 0
    loop: start=0, step=1, limit=4
    $region2: #{tpu_custom_call.1} parent=1 // loop_pre_header
      _
    $region3: #{tpu_custom_call.1} parent=1 // loop_header
      %s17 = sphi 0, %s21
      %p18 = scmp.ge.s32.totalorder %s17, 4
      %s24 = sphi 0, %s36
      %s25 = sphi 0, %s32
      %s26 = sphi 0, %s24
      %s27 = sphi 0, %s25
      %s28 = sphi 0, %s26
      %s29 = sphi 0, %s27
      %s41 = sphi 0, %s43
      %s44 = sphi 0, %s41
      %s45 = sphi 0, %s44
      %s61 = sphi 0, %s45
      %s69 = sphi 0, %s71
      %s72 = sphi 0, %s69
      %s73 = sphi 0, %s72
      %s89 = sphi 0, %s73
      %s97 = sphi 0, %s99
      %s100 = sphi 0, %s97
      %s101 = sphi 0, %s100
      %s117 = sphi 0, %s101
    $region4: #{tpu_custom_call.1} parent=1 // loop_header_branch
      %20 = sbr.rel (%p18) target = $region8
    $region5: #{tpu_custom_call.1} parent=1 // loop_body
      %s22 = ssub.s32 %s17, 1
      %s23 = ssub.s32 %s17, 2
      %s30 = sadd.s32 1, %s25
      %p31 = scmp.ge.s32.totalorder %s30, 1
      %s32 = scalar_select %p31, 0, %s30
      %s33 = sadd.s32 1, %s24
      %s34 = scalar_select %p31, %s33, %s24
      %p35 = scmp.ge.s32.totalorder %s34, 2
      %s36 = scalar_select %p35, 0, %s34
      %s37 = ssub.s32 %s24, %s36
      %s38 = ssub.s32 %s25, %s32
      %s39 = sor.u32 %s37, %s38
      %p40 = scmp.eq.s32.totalorder %s39, 0
      %s42 = sadd.s32 %s41, 1
      %s43 = scalar_select %p40, %s41, %s42
      %p46 = pneg %p40
      %p47 = scmp.eq.s32.totalorder %s17, 1
      %p48 = por %p46, %p47
      %p49 = scmp.ne.s32.totalorder %s41, %s44
      %p50 = scmp.eq.s32.totalorder %s17, 0
      %p51 = por %p49, %p50
      %p52 = scmp.ne.s32.totalorder %s41, %s44
      %p53 = scmp.eq.s32.totalorder %s22, 1
      %p54 = por %p52, %p53
      %p55 = scmp.ne.s32.totalorder %s44, %s45
      %p56 = scmp.eq.s32.totalorder %s22, 0
      %p57 = por %p55, %p56
      %p58 = scmp.ne.s32.totalorder %s44, %s45
      %p59 = scmp.eq.s32.totalorder %s23, 1
      %p60 = por %p58, %p59
      %p62 = scmp.ne.s32.totalorder %s45, %s61
      %p63 = scmp.eq.s32.totalorder %s23, 0
      %p64 = por %p62, %p63
      %s65 = ssub.s32 %s24, %s36
      %s66 = ssub.s32 %s25, %s32
      %s67 = sor.u32 %s65, %s66
      %p68 = scmp.eq.s32.totalorder %s67, 0
      %s70 = sadd.s32 %s69, 1
      %s71 = scalar_select %p68, %s69, %s70
      %p74 = pneg %p68
      %p75 = scmp.eq.s32.totalorder %s17, 1
      %p76 = por %p74, %p75
      %p77 = scmp.ne.s32.totalorder %s69, %s72
      %p78 = scmp.eq.s32.totalorder %s17, 0
      %p79 = por %p77, %p78
      %p80 = scmp.ne.s32.totalorder %s69, %s72
      %p81 = scmp.eq.s32.totalorder %s22, 1
      %p82 = por %p80, %p81
      %p83 = scmp.ne.s32.totalorder %s72, %s73
      %p84 = scmp.eq.s32.totalorder %s22, 0
      %p85 = por %p83, %p84
      %p86 = scmp.ne.s32.totalorder %s72, %s73
      %p87 = scmp.eq.s32.totalorder %s23, 1
      %p88 = por %p86, %p87
      %p90 = scmp.ne.s32.totalorder %s73, %s89
      %p91 = scmp.eq.s32.totalorder %s23, 0
      %p92 = por %p90, %p91
      %s93 = ssub.s32 %s24, %s36
      %s94 = ssub.s32 %s25, %s32
      %s95 = sor.u32 %s93, %s94
      %p96 = scmp.eq.s32.totalorder %s95, 0
      %s98 = sadd.s32 %s97, 1
      %s99 = scalar_select %p96, %s97, %s98
      %p102 = pneg %p96
      %p103 = scmp.eq.s32.totalorder %s17, 1
      %p104 = por %p102, %p103
      %p105 = scmp.ne.s32.totalorder %s97, %s100
      %p106 = scmp.eq.s32.totalorder %s17, 0
      %p107 = por %p105, %p106
      %p108 = scmp.ne.s32.totalorder %s97, %s100
      %p109 = scmp.eq.s32.totalorder %s22, 1
      %p110 = por %p108, %p109
      %p111 = scmp.ne.s32.totalorder %s100, %s101
      %p112 = scmp.eq.s32.totalorder %s22, 0
      %p113 = por %p111, %p112
      %p114 = scmp.ne.s32.totalorder %s100, %s101
      %p115 = scmp.eq.s32.totalorder %s23, 1
      %p116 = por %p114, %p115
      %p118 = scmp.ne.s32.totalorder %s101, %s117
      %p119 = scmp.eq.s32.totalorder %s23, 0
      %p120 = por %p118, %p119
      %p121 = scmp.le.s32.totalorder 1, %s17
      %p122 = scmp.lt.s32.totalorder %s17, 3
      %p123 = pnand %p121, %p122
      %p124 = pneg %p123
      // Predicated region
      $region9: #{tpu_custom_call.1} parent=5 // pred_check
        _
      $region10: #{tpu_custom_call.1} parent=5 // pred_check_branch
        %126 = sbr.rel (%p123) target = $region12
      $region11: #{tpu_custom_call.1} parent=5 // pred_region
        %s127 = ssub.s32 %s17, 1
      $region12: #{tpu_custom_call.1} parent=5 // pred_fallthru
        _
      %p128 = scmp.lt.s32.totalorder %s17, 2
      // Predicated region
      $region13: #{tpu_custom_call.1} parent=5 // pred_check
        %p129 = pneg %p128
      $region14: #{tpu_custom_call.1} parent=5 // pred_check_branch
        %131 = sbr.rel (%p129) target = $region16
      $region15: #{tpu_custom_call.1} parent=5 // pred_region
        // Predicated region
        $region17: #{tpu_custom_call.1} parent=15 // pred_check
          %p132 = pneg %p51
        $region18: #{tpu_custom_call.1} parent=15 // pred_check_branch
          %134 = sbr.rel (%p132) target = $region20
        $region19: #{tpu_custom_call.1} parent=15 // pred_region
          %s135 = sand.u32 %s41, 1
          %s136 = scalar_lea.sflag [#allocation3], %s135
          %s137 = sand.u32 %s41, 1
          %s138 = smul.addr %s137, 8
          %s139 = scalar_lea.vmem [#allocation2], %s138
          %141 = vsyncadd %s136, 0
          %s142 = sadd.s32 %s25, %s24
          %s143 = smul.addr %s142, 8
          %s144 = scalar_lea.hbm %s0, %s143
          %s146 = sshll.u32 %s144, 4
          %s147 = int_to_ptr.hbm [resolvable:$true] %s146
          %s148 = sshll.u32 %s139, 4
          %s149 = int_to_ptr.vmem [resolvable:$true] %s148
          %151 = dma.hbm_to_vmem [thread:$0]  %s147, 128, %s149, %s136
        $region20: #{tpu_custom_call.1} parent=15 // pred_fallthru
          _
        // Predicated region
        $region21: #{tpu_custom_call.1} parent=15 // pred_check
          %p152 = pneg %p79
        $region22: #{tpu_custom_call.1} parent=15 // pred_check_branch
          %154 = sbr.rel (%p152) target = $region24
        $region23: #{tpu_custom_call.1} parent=15 // pred_region
          %s155 = sand.u32 %s69, 1
          %s156 = scalar_lea.sflag [#allocation6], %s155
          %s157 = sand.u32 %s69, 1
          %s158 = smul.addr %s157, 72
          %s159 = scalar_lea.vmem [#allocation5], %s158
          %161 = vsyncadd %s156, 0
          %s162 = smul.addr %s24, 9
          %s163 = sadd.s32 %s25, %s162
          %s164 = smul.addr %s163, 8
          %s165 = scalar_lea.hbm %s1, %s164
          %s166 = sshll.u32 %s165, 4
          %s167 = int_to_ptr.hbm [resolvable:$true] %s166
          %s168 = sshll.u32 %s159, 4
          %s169 = int_to_ptr.vmem [resolvable:$true] %s168
          %174 = dma.hbm_to_vmem [thread:$0]  %s167, 1152, %s169, %s156, 128, 128, 8
        $region24: #{tpu_custom_call.1} parent=15 // pred_fallthru
          _
      $region16: #{tpu_custom_call.1} parent=5 // pred_fallthru
        _
      %p175 = scmp.le.s32.totalorder 1, %s17
      %p176 = scmp.lt.s32.totalorder %s17, 3
      %p177 = pnand %p175, %p176
      %p178 = pneg %p177
      // Predicated region
      $region25: #{tpu_custom_call.1} parent=5 // pred_check
        _
      $region26: #{tpu_custom_call.1} parent=5 // pred_check_branch
        %180 = sbr.rel (%p177) target = $region28
      $region27: #{tpu_custom_call.1} parent=5 // pred_region
        %s181 = ssub.s32 %s17, 1
        %s182 = sand.u32 %s44, 1
        %s183 = scalar_lea.sflag [#allocation3], %s182
        %s184 = sand.u32 %s44, 1
        %s185 = smul.addr %s184, 8
        %s186 = scalar_lea.vmem [#allocation2], %s185
        // Predicated region
        $region29: #{tpu_custom_call.1} parent=27 // pred_check
          %p187 = pneg %p57
        $region30: #{tpu_custom_call.1} parent=27 // pred_check_branch
          %189 = sbr.rel (%p187) target = $region32
        $region31: #{tpu_custom_call.1} parent=27 // pred_region
          %191 = dma.done %s183, 128
        $region32: #{tpu_custom_call.1} parent=27 // pred_fallthru
          _
        %s192 = sand.u32 %s72, 1
        %s193 = scalar_lea.sflag [#allocation6], %s192
        %s194 = sand.u32 %s72, 1
        %s195 = smul.addr %s194, 72
        %s196 = scalar_lea.vmem [#allocation5], %s195
        // Predicated region
        $region33: #{tpu_custom_call.1} parent=27 // pred_check
          %p197 = pneg %p85
        $region34: #{tpu_custom_call.1} parent=27 // pred_check_branch
          %199 = sbr.rel (%p197) target = $region36
        $region35: #{tpu_custom_call.1} parent=27 // pred_region
          %201 = dma.done %s193, 1152
        $region36: #{tpu_custom_call.1} parent=27 // pred_fallthru
          _
        %s202 = sand.u32 %s44, 1
        %s203 = scalar_lea.sflag [#allocation3], %s202
        %s204 = sand.u32 %s44, 1
        %s205 = smul.addr %s204, 8
        %s206 = scalar_lea.vmem [#allocation2], %s205
        %p207 = pneg %p57
        %p208 = pneg %p54
        %s209 = sand.u32 %s72, 1
        %s210 = scalar_lea.sflag [#allocation6], %s209
        %s211 = sand.u32 %s72, 1
        %s212 = smul.addr %s211, 72
        %s213 = scalar_lea.vmem [#allocation5], %s212
        %p214 = pneg %p85
        %p215 = pneg %p82
        %p216 = pneg %p113
        %p217 = pneg %p110
        %s218 = sand.u32 %s100, 1
        %s219 = scalar_lea.sflag [#allocation4], %s218
        %s220 = sand.u32 %s100, 1
        %s221 = smul.addr %s220, 8
        %s222 = scalar_lea.vmem [#allocation7], %s221
        %v223 = vld [vmem:[%s186] sm:$0xff]
        %v224 = vld [vmem:[%s196] sm:$0xff]
        %s225 = scalar_lea.vmem %s196, 24 [#allocation5]
        %v226 = vld [vmem:[%s225] sm:$0xff]
        %s227 = scalar_lea.vmem %s196, 48 [#allocation5]
        %v228 = vld [vmem:[%s227] sm:$0xff]
        %v229 = vmax.f32 %v224, %v226
        %v230 = vmax.f32 %v229, %v228
        %v231 = vsub.f32 %v224, %v230
        %v232 = vmul.f32 %v231, 1.442695
        %v233 = vpow.pop %v232
        %v234 = vsub.f32 %v226, %v230
        %v235 = vmul.f32 %v234, 1.442695
        %v236 = vpow.pop %v235
        %v237 = vsub.f32 %v228, %v230
        %v238 = vmul.f32 %v237, 1.442695
        %v239 = vpow.pop %v238
        %v240 = vadd.f32 %v233, %v236
        %v241 = vadd.f32 %v240, %v239
        %v242 = vrcp.pop %v241
        %v243 = vmul.f32 %v241, %v242
        %v244 = vsub.f32 1.0, %v243
        %v245 = vmul.f32 %v242, %v244
        %v246 = vadd.f32 %v242, %v245
        %vm247 = vweird.f32 %v241
        %vm248 = vweird.f32 %v242
        %vm249 = vmor %vm247, %vm248
        %v250 = vsel %vm249, %v242, %v246
        %v251 = vand.u32 2147483647, %v241
        %vm252 = vcmp.eq.f32.partialorder %v251, 8.507059e+37
        %v253 = vand.u32 %v241, 2147483648
        %v254 = vor.u32 1.1754944e-38, %v253
        %v255 = vsel %vm252, %v254, %v250
        %v256 = vmul.f32 %v255, 0.5
        %v257 = vmul.f32 %v233, %v256
        %v258 = vmul.f32 %v236, %v256
        %v259 = vmul.f32 %v239, %v256
        %s260 = scalar_lea.vmem %s196, 8 [#allocation5]
        %v261 = vld [vmem:[%s260] sm:$0xff]
        %s262 = scalar_lea.vmem %s196, 16 [#allocation5]
        %v263 = vld [vmem:[%s262] sm:$0xff]
        %v264 = vmax.f32 %v263, 1e-06
        %v265 = vrcp.pop %v264
        %v266 = vmul.f32 %v264, %v265
        %v267 = vsub.f32 1.0, %v266
        %v268 = vmul.f32 %v265, %v267
        %v269 = vadd.f32 %v265, %v268
        %vm270 = vweird.f32 %v264
        %vm271 = vweird.f32 %v265
        %vm272 = vmor %vm270, %vm271
        %v273 = vsel %vm272, %v265, %v269
        %v274 = vand.u32 2147483647, %v264
        %vm275 = vcmp.eq.f32.partialorder %v274, 8.507059e+37
        %v276 = vand.u32 %v264, 2147483648
        %v277 = vor.u32 1.1754944e-38, %v276
        %v278 = vsel %vm275, %v277, %v273
        %v279 = vmul.f32 %v278, 0.70710677
        %v280 = vsub.f32 %v223, %v261
        %v281 = vmul.f32 %v280, %v279
        %v282 = vmul.f32 %v279, 0.5
        %v283 = vadd.f32 %v281, %v282
        %v284 = vmul.f32 %v283, %v283
        %v285 = vmin.f32 16.0, %v284
        %v286 = vmul.f32 %v285, 2.1237322e-06
        %v287 = vadd.f32 %v286, 0.00028619796
        %v288 = vmul.f32 %v285, %v287
        %v289 = vadd.f32 %v288, 0.0036580483
        %v290 = vmul.f32 %v285, %v289
        %v291 = vadd.f32 %v290, 0.05243302
        %v292 = vmul.f32 %v285, %v291
        %v293 = vadd.f32 %v292, 0.18741608
        %v294 = vmul.f32 %v285, %v293
        %v295 = vadd.f32 %v294, 1.1283791
        %v296 = vmul.f32 %v283, %v295
        %v297 = vmul.f32 %v285, 3.8918573e-05
        %v298 = vadd.f32 %v297, 0.001143296
        %v299 = vmul.f32 %v285, %v298
        %v300 = vadd.f32 %v299, 0.014752088
        %v301 = vmul.f32 %v285, %v300
        %v302 = vadd.f32 %v301, 0.112945676
        %v303 = vmul.f32 %v285, %v302
        %v304 = vadd.f32 %v303, 0.4994258
        %v305 = vmul.f32 %v285, %v304
        %v306 = vadd.f32 %v305, 1.0
        %v307 = vrcp.pop %v306
        %v308 = vmul.f32 %v306, %v307
        %v309 = vsub.f32 1.0, %v308
        %v310 = vmul.f32 %v307, %v309
        %v311 = vadd.f32 %v307, %v310
        %vm312 = vweird.f32 %v306
        %vm313 = vweird.f32 %v307
        %vm314 = vmor %vm312, %vm313
        %v315 = vsel %vm314, %v307, %v311
        %v316 = vand.u32 2147483647, %v306
        %vm317 = vcmp.eq.f32.partialorder %v316, 8.507059e+37
        %v318 = vand.u32 %v306, 2147483648
        %v319 = vor.u32 1.1754944e-38, %v318
        %v320 = vsel %vm317, %v319, %v315
        %v321 = vmul.f32 %v296, %v320
        %v322 = vmin.f32 %v321, 1.0
        %v323 = vmax.f32 %v322, -1.0
        %v324 = vsub.f32 %v281, %v282
        %v325 = vmul.f32 %v324, %v324
        %v326 = vmin.f32 16.0, %v325
        %v327 = vmul.f32 %v326, 2.1237322e-06
        %v328 = vadd.f32 %v327, 0.00028619796
        %v329 = vmul.f32 %v326, %v328
        %v330 = vadd.f32 %v329, 0.0036580483
        %v331 = vmul.f32 %v326, %v330
        %v332 = vadd.f32 %v331, 0.05243302
        %v333 = vmul.f32 %v326, %v332
        %v334 = vadd.f32 %v333, 0.18741608
        %v335 = vmul.f32 %v326, %v334
        %v336 = vadd.f32 %v335, 1.1283791
        %v337 = vmul.f32 %v324, %v336
        %v338 = vmul.f32 %v326, 3.8918573e-05
        %v339 = vadd.f32 %v338, 0.001143296
        %v340 = vmul.f32 %v326, %v339
        %v341 = vadd.f32 %v340, 0.014752088
        %v342 = vmul.f32 %v326, %v341
        %v343 = vadd.f32 %v342, 0.112945676
        %v344 = vmul.f32 %v326, %v343
        %v345 = vadd.f32 %v344, 0.4994258
        %v346 = vmul.f32 %v326, %v345
        %v347 = vadd.f32 %v346, 1.0
        %v348 = vrcp.pop %v347
        %v349 = vmul.f32 %v347, %v348
        %v350 = vsub.f32 1.0, %v349
        %v351 = vmul.f32 %v348, %v350
        %v352 = vadd.f32 %v348, %v351
        %vm353 = vweird.f32 %v347
        %vm354 = vweird.f32 %v348
        %vm355 = vmor %vm353, %vm354
        %v356 = vsel %vm355, %v348, %v352
        %v357 = vand.u32 2147483647, %v347
        %vm358 = vcmp.eq.f32.partialorder %v357, 8.507059e+37
        %v359 = vand.u32 %v347, 2147483648
        %v360 = vor.u32 1.1754944e-38, %v359
        %v361 = vsel %vm358, %v360, %v356
        %v362 = vmul.f32 %v337, %v361
        %v363 = vmin.f32 %v362, 1.0
        %v364 = vmax.f32 %v363, -1.0
        %v365 = vsub.f32 %v323, %v364
        %v366 = vand.u32 2147483647, %v365
        %v367 = vmul.f32 %v257, %v366
        %s368 = scalar_lea.vmem %s196, 32 [#allocation5]
        %v369 = vld [vmem:[%s368] sm:$0xff]
        %s370 = scalar_lea.vmem %s196, 40 [#allocation5]
        %v371 = vld [vmem:[%s370] sm:$0xff]
        %v372 = vmax.f32 %v371, 1e-06
        %v373 = vrcp.pop %v372
        %v374 = vmul.f32 %v372, %v373
        %v375 = vsub.f32 1.0, %v374
        %v376 = vmul.f32 %v373, %v375
        %v377 = vadd.f32 %v373, %v376
        %vm378 = vweird.f32 %v372
        %vm379 = vweird.f32 %v373
        %vm380 = vmor %vm378, %vm379
        %v381 = vsel %vm380, %v373, %v377
        %v382 = vand.u32 2147483647, %v372
        %vm383 = vcmp.eq.f32.partialorder %v382, 8.507059e+37
        %v384 = vand.u32 %v372, 2147483648
        %v385 = vor.u32 1.1754944e-38, %v384
        %v386 = vsel %vm383, %v385, %v381
        %v387 = vmul.f32 %v386, 0.70710677
        %v388 = vsub.f32 %v223, %v369
        %v389 = vmul.f32 %v388, %v387
        %v390 = vmul.f32 %v387, 0.5
        %v391 = vadd.f32 %v389, %v390
        %v392 = vmul.f32 %v391, %v391
        %v393 = vmin.f32 16.0, %v392
        %v394 = vmul.f32 %v393, 2.1237322e-06
        %v395 = vadd.f32 %v394, 0.00028619796
        %v396 = vmul.f32 %v393, %v395
        %v397 = vadd.f32 %v396, 0.0036580483
        %v398 = vmul.f32 %v393, %v397
        %v399 = vadd.f32 %v398, 0.05243302
        %v400 = vmul.f32 %v393, %v399
        %v401 = vadd.f32 %v400, 0.18741608
        %v402 = vmul.f32 %v393, %v401
        %v403 = vadd.f32 %v402, 1.1283791
        %v404 = vmul.f32 %v391, %v403
        %v405 = vmul.f32 %v393, 3.8918573e-05
        %v406 = vadd.f32 %v405, 0.001143296
        %v407 = vmul.f32 %v393, %v406
        %v408 = vadd.f32 %v407, 0.014752088
        %v409 = vmul.f32 %v393, %v408
        %v410 = vadd.f32 %v409, 0.112945676
        %v411 = vmul.f32 %v393, %v410
        %v412 = vadd.f32 %v411, 0.4994258
        %v413 = vmul.f32 %v393, %v412
        %v414 = vadd.f32 %v413, 1.0
        %v415 = vrcp.pop %v414
        %v416 = vmul.f32 %v414, %v415
        %v417 = vsub.f32 1.0, %v416
        %v418 = vmul.f32 %v415, %v417
        %v419 = vadd.f32 %v415, %v418
        %vm420 = vweird.f32 %v414
        %vm421 = vweird.f32 %v415
        %vm422 = vmor %vm420, %vm421
        %v423 = vsel %vm422, %v415, %v419
        %v424 = vand.u32 2147483647, %v414
        %vm425 = vcmp.eq.f32.partialorder %v424, 8.507059e+37
        %v426 = vand.u32 %v414, 2147483648
        %v427 = vor.u32 1.1754944e-38, %v426
        %v428 = vsel %vm425, %v427, %v423
        %v429 = vmul.f32 %v404, %v428
        %v430 = vmin.f32 %v429, 1.0
        %v431 = vmax.f32 %v430, -1.0
        %v432 = vsub.f32 %v389, %v390
        %v433 = vmul.f32 %v432, %v432
        %v434 = vmin.f32 16.0, %v433
        %v435 = vmul.f32 %v434, 2.1237322e-06
        %v436 = vadd.f32 %v435, 0.00028619796
        %v437 = vmul.f32 %v434, %v436
        %v438 = vadd.f32 %v437, 0.0036580483
        %v439 = vmul.f32 %v434, %v438
        %v440 = vadd.f32 %v439, 0.05243302
        %v441 = vmul.f32 %v434, %v440
        %v442 = vadd.f32 %v441, 0.18741608
        %v443 = vmul.f32 %v434, %v442
        %v444 = vadd.f32 %v443, 1.1283791
        %v445 = vmul.f32 %v432, %v444
        %v446 = vmul.f32 %v434, 3.8918573e-05
        %v447 = vadd.f32 %v446, 0.001143296
        %v448 = vmul.f32 %v434, %v447
        %v449 = vadd.f32 %v448, 0.014752088
        %v450 = vmul.f32 %v434, %v449
        %v451 = vadd.f32 %v450, 0.112945676
        %v452 = vmul.f32 %v434, %v451
        %v453 = vadd.f32 %v452, 0.4994258
        %v454 = vmul.f32 %v434, %v453
        %v455 = vadd.f32 %v454, 1.0
        %v456 = vrcp.pop %v455
        %v457 = vmul.f32 %v455, %v456
        %v458 = vsub.f32 1.0, %v457
        %v459 = vmul.f32 %v456, %v458
        %v460 = vadd.f32 %v456, %v459
        %vm461 = vweird.f32 %v455
        %vm462 = vweird.f32 %v456
        %vm463 = vmor %vm461, %vm462
        %v464 = vsel %vm463, %v456, %v460
        %v465 = vand.u32 2147483647, %v455
        %vm466 = vcmp.eq.f32.partialorder %v465, 8.507059e+37
        %v467 = vand.u32 %v455, 2147483648
        %v468 = vor.u32 1.1754944e-38, %v467
        %v469 = vsel %vm466, %v468, %v464
        %v470 = vmul.f32 %v445, %v469
        %v471 = vmin.f32 %v470, 1.0
        %v472 = vmax.f32 %v471, -1.0
        %v473 = vsub.f32 %v431, %v472
        %v474 = vand.u32 2147483647, %v473
        %v475 = vmul.f32 %v258, %v474
        %v476 = vadd.f32 %v367, %v475
        %s477 = scalar_lea.vmem %s196, 56 [#allocation5]
        %v478 = vld [vmem:[%s477] sm:$0xff]
        %s479 = scalar_lea.vmem %s196, 64 [#allocation5]
        %v480 = vld [vmem:[%s479] sm:$0xff]
        %v481 = vmax.f32 %v480, 1e-06
        %v482 = vrcp.pop %v481
        %v483 = vmul.f32 %v481, %v482
        %v484 = vsub.f32 1.0, %v483
        %v485 = vmul.f32 %v482, %v484
        %v486 = vadd.f32 %v482, %v485
        %vm487 = vweird.f32 %v481
        %vm488 = vweird.f32 %v482
        %vm489 = vmor %vm487, %vm488
        %v490 = vsel %vm489, %v482, %v486
        %v491 = vand.u32 2147483647, %v481
        %vm492 = vcmp.eq.f32.partialorder %v491, 8.507059e+37
        %v493 = vand.u32 %v481, 2147483648
        %v494 = vor.u32 1.1754944e-38, %v493
        %v495 = vsel %vm492, %v494, %v490
        %v496 = vmul.f32 %v495, 0.70710677
        %v497 = vsub.f32 %v223, %v478
        %v498 = vmul.f32 %v497, %v496
        %v499 = vmul.f32 %v496, 0.5
        %v500 = vadd.f32 %v498, %v499
        %v501 = vmul.f32 %v500, %v500
        %v502 = vmin.f32 16.0, %v501
        %v503 = vmul.f32 %v502, 2.1237322e-06
        %v504 = vadd.f32 %v503, 0.00028619796
        %v505 = vmul.f32 %v502, %v504
        %v506 = vadd.f32 %v505, 0.0036580483
        %v507 = vmul.f32 %v502, %v506
        %v508 = vadd.f32 %v507, 0.05243302
        %v509 = vmul.f32 %v502, %v508
        %v510 = vadd.f32 %v509, 0.18741608
        %v511 = vmul.f32 %v502, %v510
        %v512 = vadd.f32 %v511, 1.1283791
        %v513 = vmul.f32 %v500, %v512
        %v514 = vmul.f32 %v502, 3.8918573e-05
        %v515 = vadd.f32 %v514, 0.001143296
        %v516 = vmul.f32 %v502, %v515
        %v517 = vadd.f32 %v516, 0.014752088
        %v518 = vmul.f32 %v502, %v517
        %v519 = vadd.f32 %v518, 0.112945676
        %v520 = vmul.f32 %v502, %v519
        %v521 = vadd.f32 %v520, 0.4994258
        %v522 = vmul.f32 %v502, %v521
        %v523 = vadd.f32 %v522, 1.0
        %v524 = vrcp.pop %v523
        %v525 = vmul.f32 %v523, %v524
        %v526 = vsub.f32 1.0, %v525
        %v527 = vmul.f32 %v524, %v526
        %v528 = vadd.f32 %v524, %v527
        %vm529 = vweird.f32 %v523
        %vm530 = vweird.f32 %v524
        %vm531 = vmor %vm529, %vm530
        %v532 = vsel %vm531, %v524, %v528
        %v533 = vand.u32 2147483647, %v523
        %vm534 = vcmp.eq.f32.partialorder %v533, 8.507059e+37
        %v535 = vand.u32 %v523, 2147483648
        %v536 = vor.u32 1.1754944e-38, %v535
        %v537 = vsel %vm534, %v536, %v532
        %v538 = vmul.f32 %v513, %v537
        %v539 = vmin.f32 %v538, 1.0
        %v540 = vmax.f32 %v539, -1.0
        %v541 = vsub.f32 %v498, %v499
        %v542 = vmul.f32 %v541, %v541
        %v543 = vmin.f32 16.0, %v542
        %v544 = vmul.f32 %v543, 2.1237322e-06
        %v545 = vadd.f32 %v544, 0.00028619796
        %v546 = vmul.f32 %v543, %v545
        %v547 = vadd.f32 %v546, 0.0036580483
        %v548 = vmul.f32 %v543, %v547
        %v549 = vadd.f32 %v548, 0.05243302
        %v550 = vmul.f32 %v543, %v549
        %v551 = vadd.f32 %v550, 0.18741608
        %v552 = vmul.f32 %v543, %v551
        %v553 = vadd.f32 %v552, 1.1283791
        %v554 = vmul.f32 %v541, %v553
        %v555 = vmul.f32 %v543, 3.8918573e-05
        %v556 = vadd.f32 %v555, 0.001143296
        %v557 = vmul.f32 %v543, %v556
        %v558 = vadd.f32 %v557, 0.014752088
        %v559 = vmul.f32 %v543, %v558
        %v560 = vadd.f32 %v559, 0.112945676
        %v561 = vmul.f32 %v543, %v560
        %v562 = vadd.f32 %v561, 0.4994258
        %v563 = vmul.f32 %v543, %v562
        %v564 = vadd.f32 %v563, 1.0
        %v565 = vrcp.pop %v564
        %v566 = vmul.f32 %v564, %v565
        %v567 = vsub.f32 1.0, %v566
        %v568 = vmul.f32 %v565, %v567
        %v569 = vadd.f32 %v565, %v568
        %vm570 = vweird.f32 %v564
        %vm571 = vweird.f32 %v565
        %vm572 = vmor %vm570, %vm571
        %v573 = vsel %vm572, %v565, %v569
        %v574 = vand.u32 2147483647, %v564
        %vm575 = vcmp.eq.f32.partialorder %v574, 8.507059e+37
        %v576 = vand.u32 %v564, 2147483648
        %v577 = vor.u32 1.1754944e-38, %v576
        %v578 = vsel %vm575, %v577, %v573
        %v579 = vmul.f32 %v554, %v578
        %v580 = vmin.f32 %v579, 1.0
        %v581 = vmax.f32 %v580, -1.0
        %v582 = vsub.f32 %v540, %v581
        %v583 = vand.u32 2147483647, %v582
        %v584 = vmul.f32 %v259, %v583
        %v585 = vadd.f32 %v476, %v584
        %v586 = vmax.f32 %v585, 1e-06
        %587 = vst [vmem:[%s222] sm:$0xff] %v586
        %s588 = sand.u32 %s100, 1
        %s589 = scalar_lea.sflag [#allocation4], %s588
        %s590 = sand.u32 %s100, 1
        %s591 = smul.addr %s590, 8
        %s592 = scalar_lea.vmem [#allocation7], %s591
        // Predicated region
        $region37: #{tpu_custom_call.1} parent=27 // pred_check
          %p593 = pneg %p110
        $region38: #{tpu_custom_call.1} parent=27 // pred_check_branch
          %595 = sbr.rel (%p593) target = $region40
        $region39: #{tpu_custom_call.1} parent=27 // pred_region
          %597 = vsyncadd %s589, 0
          %s598 = sadd.s32 %s27, %s26
          %s599 = smul.addr %s598, 8
          %s600 = scalar_lea.hbm %s2, %s599
          %s602 = sshll.u32 %s592, 4
          %s603 = int_to_ptr.vmem [resolvable:$true] %s602
          %s604 = sshll.u32 %s600, 4
          %s605 = int_to_ptr.hbm [resolvable:$true] %s604
          %607 = dma.vmem_to_hbm [thread:$0]  %s603, 128, %s605, %s589
        $region40: #{tpu_custom_call.1} parent=27 // pred_fallthru
          _
      $region28: #{tpu_custom_call.1} parent=5 // pred_fallthru
        _
      %p608 = scmp.le.s32.totalorder 2, %s17
      // Predicated region
      $region41: #{tpu_custom_call.1} parent=5 // pred_check
        %p609 = pneg %p608
      $region42: #{tpu_custom_call.1} parent=5 // pred_check_branch
        %611 = sbr.rel (%p609) target = $region44
      $region43: #{tpu_custom_call.1} parent=5 // pred_region
        %s612 = ssub.s32 %s17, 2
        // Predicated region
        $region45: #{tpu_custom_call.1} parent=43 // pred_check
          %p613 = pneg %p116
        $region46: #{tpu_custom_call.1} parent=43 // pred_check_branch
          %615 = sbr.rel (%p613) target = $region48
        $region47: #{tpu_custom_call.1} parent=43 // pred_region
          %s616 = sand.u32 %s101, 1
          %s617 = scalar_lea.sflag [#allocation4], %s616
          %s618 = sand.u32 %s101, 1
          %s619 = smul.addr %s618, 8
          %s620 = scalar_lea.vmem [#allocation7], %s619
          %622 = dma.done %s617, 128
        $region48: #{tpu_custom_call.1} parent=43 // pred_fallthru
          _
      $region44: #{tpu_custom_call.1} parent=5 // pred_fallthru
        _
    $region6: #{tpu_custom_call.1} parent=1 // loop_footer
      %s21 = sadd.s32 1, %s17
    $region7: #{tpu_custom_call.1} parent=1 // loop_footer_branch
      %16 = sbr.rel target = $region3
    $region8: #{tpu_custom_call.1} parent=1 // loop_exit
      _
    %623 = vsyncpa [#allocation3], 1
    %s624 = scalar_lea.sflag [#allocation3], 1
    %625 = vsyncpa %s624, 1
    %626 = vsyncpa [#allocation6], 1
    %s627 = scalar_lea.sflag [#allocation6], 1
    %628 = vsyncpa %s627, 1
    %629 = vsyncpa [#allocation4], 1
    %s630 = scalar_lea.sflag [#allocation4], 1
    %631 = vsyncpa %s630, 1

</llo_original>
